<compile_context>
chip_gen: v7x
topology: tpu7x:2x2x1
jax: 0.10.0
libtpu: 0.0.40
codegen_flags: <defaults>
</compile_context>

<pallas_src>
import math
import jax
import jax.numpy as jnp
from jax.experimental import pallas as pl
from jax.experimental.pallas import tpu as pltpu


def mlp_kernel(xt_ref, w1_ref, b1_ref, w2_ref, b2_ref, w3t_ref, b3_ref, o_ref):
    xt = xt_ref[...]                                   # (F, tn)  lane-dense batch

    # ---- Layer 1: h1 = relu(W1 @ x^T + b1) ----------------------------------
    # F == 1 -> outer product on the VPU (a K=1 MXU matmul would be <1% utilized).
    if xt_ref.shape[0] == 1:
        h1 = w1_ref[...] * xt                          # (H1,1)*(1,tn) -> (H1,tn)
    else:
        h1 = jnp.dot(w1_ref[...], xt, preferred_element_type=jnp.float32)
    h1 = jnp.maximum(h1 + b1_ref[...], 0.0)            # (H1, tn)

    # ---- Layer 2: h2 = relu(W2 @ h1 + b2) -----------------------------------
    # The only real contraction (H2 x H1 x tn) -> keep it on the MXU, f32 acc.
    h2 = jnp.dot(w2_ref[...], h1, preferred_element_type=jnp.float32)
    h2 = jnp.maximum(h2 + b2_ref[...], 0.0)            # (H2, tn)

    # ---- Layer 3: out = W3 @ h2 + b3 ----------------------------------------
    # O == 1 -> VPU multiply + cross-sublane (XLU) reduce; keeps the MXU free.
    if w3t_ref.shape[1] == 1:
        out = jnp.sum(h2 * w3t_ref[...], axis=0, keepdims=True)   # (1, tn)
    else:
        out = jnp.dot(w3t_ref[...].T, h2, preferred_element_type=jnp.float32)

    o_ref[...] = (out + b3_ref[...]).astype(o_ref.dtype)          # lane-dense store


def net_forward(x, w1, b1, w2, b2, w3, b3, *, tn=None):
    """x: (N, F). Weights in PyTorch layout: w_i (out, in), b_i (out,). Returns (N, O)."""
    N, F = x.shape
    H1 = w1.shape[0]
    H2 = w2.shape[0]
    O = w3.shape[0]

    # Batch tile along the lane axis. Default: one big tile (grid=(1,)).
    if tn is None:
        tn = N
    assert N % tn == 0, "batch must be divisible by the lane tile"
    assert tn == N or tn % 128 == 0, "lane tile must be a multiple of 128 (or the full batch)"

    # Transposed, lane-dense presentation (cheap reshapes/transposes in the wrapper).
    xt = x.T                          # (F, N)   batch on lanes
    b1c = b1.reshape(H1, 1)
    b2c = b2.reshape(H2, 1)
    b3c = b3.reshape(O, 1)
    w3t = w3.T                        # (H2, O)  column vector for the VPU reduce

    grid = (N // tn,)

    flops = 2 * N * (F * H1 + H1 * H2 + H2 * O) + N * (H1 + H2 + O)
    bytes_accessed = 4 * (N * F + F * H1 + H1 + H1 * H2 + H2 + H2 * O + O + N * O)

    out_t = pl.pallas_call(
        mlp_kernel,
        out_shape=jax.ShapeDtypeStruct((O, N), x.dtype),
        grid_spec=pltpu.PrefetchScalarGridSpec(
            num_scalar_prefetch=0,
            grid=grid,
            in_specs=[
                pl.BlockSpec((F, tn), lambda i: (0, i)),    # x^T batch tile (lane-dense)
                pl.BlockSpec((H1, F), lambda i: (0, 0)),    # W1 (full, grid-invariant)
                pl.BlockSpec((H1, 1), lambda i: (0, 0)),    # b1
                pl.BlockSpec((H2, H1), lambda i: (0, 0)),   # W2
                pl.BlockSpec((H2, 1), lambda i: (0, 0)),    # b2
                pl.BlockSpec((H2, O), lambda i: (0, 0)),    # W3^T
                pl.BlockSpec((O, 1), lambda i: (0, 0)),     # b3
            ],
            out_specs=pl.BlockSpec((O, tn), lambda i: (0, i)),
        ),
        compiler_params=pltpu.CompilerParams(
            dimension_semantics=("parallel",)),
        cost_estimate=pl.CostEstimate(
            flops=flops, transcendentals=0, bytes_accessed=bytes_accessed),
    )(xt, w1, b1c, w2, b2c, w3t, b3c)

    return out_t.T                    # (N, O)


def init_linear(key, fan_in, fan_out):
    # Mirrors torch.nn.Linear default init: U(-1/sqrt(fan_in), 1/sqrt(fan_in)).
    # PyTorch layout: W (out, in), b (out,).
    kw, kb = jax.random.split(key)
    bound = 1.0 / math.sqrt(fan_in)
    w = jax.random.uniform(kw, (fan_out, fan_in), jnp.float32, -bound, bound)
    b = jax.random.uniform(kb, (fan_out,), jnp.float32, -bound, bound)
    return w, b


if __name__ == "__main__":
    # Small shapes consistent with the module: Net(n_feature=1, n_hidden=32,
    # n_hidden2=32, n_output=1); x is a (batch, 1) linspace column.
    n_feature, n_hidden, n_hidden2, n_output = 1, 32, 32, 1
    batch = 256

    key = jax.random.PRNGKey(0)
    k1, k2, k3 = jax.random.split(key, 3)

    x = jnp.linspace(-math.pi, math.pi, batch, dtype=jnp.float32).reshape(batch, 1)

    w1, b1 = init_linear(k1, n_feature, n_hidden)
    w2, b2 = init_linear(k2, n_hidden, n_hidden2)
    w3, b3 = init_linear(k3, n_hidden2, n_output)

    out = net_forward(x, w1, b1, w2, b2, w3, b3)   # grid=(1,), whole batch on lanes
    out = jax.block_until_ready(out)

    # Reference check (pure JAX, PyTorch semantics: x @ W.T + b).
    ref = jnp.maximum(x @ w1.T + b1, 0.0)
    ref = jnp.maximum(ref @ w2.T + b2, 0.0)
    ref = ref @ w3.T + b3

    assert out.shape == (batch, n_output)
    assert jnp.allclose(out, ref, atol=1e-5, rtol=1e-5)

    print("KERNEL_OK")
</pallas_src>

<mosaic_0001>
module attributes {stable_mosaic.version = 11 : i64} {
  func.func @mlp_kernel(%arg0: i32, %arg1: memref<1x256xf32, #tpu.memory_space<vmem>>, %arg2: memref<32x1xf32, #tpu.memory_space<vmem>>, %arg3: memref<32x1xf32, #tpu.memory_space<vmem>>, %arg4: memref<32x32xf32, #tpu.memory_space<vmem>>, %arg5: memref<32x1xf32, #tpu.memory_space<vmem>>, %arg6: memref<32x1xf32, #tpu.memory_space<vmem>>, %arg7: memref<1x1xf32, #tpu.memory_space<vmem>>, %arg8: memref<1x256xf32, #tpu.memory_space<vmem>>) attributes {dimension_semantics = [#tpu.dimension_semantics<parallel>], iteration_bounds = array<i64: 1>, scalar_prefetch = 0 : i64, scratch_operands = 0 : i64, tpu.core_type = #tpu.core_type<tc>, window_params = [{transform_indices = @transform_0, window_bounds = array<i64: 1, 256>}, {pipeline_mode = #tpu.pipeline_mode<synchronous>, transform_indices = @transform_1, window_bounds = array<i64: 32, 1>}, {pipeline_mode = #tpu.pipeline_mode<synchronous>, transform_indices = @transform_2, window_bounds = array<i64: 32, 1>}, {pipeline_mode = #tpu.pipeline_mode<synchronous>, transform_indices = @transform_3, window_bounds = array<i64: 32, 32>}, {pipeline_mode = #tpu.pipeline_mode<synchronous>, transform_indices = @transform_4, window_bounds = array<i64: 32, 1>}, {pipeline_mode = #tpu.pipeline_mode<synchronous>, transform_indices = @transform_5, window_bounds = array<i64: 32, 1>}, {pipeline_mode = #tpu.pipeline_mode<synchronous>, transform_indices = @transform_6, window_bounds = array<i64: 1, 1>}, {transform_indices = @transform_7, window_bounds = array<i64: 1, 256>}]} {
    %c0 = arith.constant 0 : index
    %c0_0 = arith.constant 0 : index
    %0 = vector.load %arg1[%c0, %c0_0] : memref<1x256xf32, #tpu.memory_space<vmem>>, vector<1x256xf32>
    %c0_1 = arith.constant 0 : index
    %c0_2 = arith.constant 0 : index
    %1 = vector.load %arg2[%c0_1, %c0_2] : memref<32x1xf32, #tpu.memory_space<vmem>>, vector<32x1xf32>
    %2 = vector.broadcast %1 : vector<32x1xf32> to vector<32x256xf32>
    %3 = vector.broadcast %0 : vector<1x256xf32> to vector<32x256xf32>
    %4 = arith.mulf %2, %3 : vector<32x256xf32>
    %c0_3 = arith.constant 0 : index
    %c0_4 = arith.constant 0 : index
    %5 = vector.load %arg3[%c0_3, %c0_4] : memref<32x1xf32, #tpu.memory_space<vmem>>, vector<32x1xf32>
    %6 = vector.broadcast %5 : vector<32x1xf32> to vector<32x256xf32>
    %7 = arith.addf %4, %6 : vector<32x256xf32>
    %cst = arith.constant 0.000000e+00 : f32
    %8 = vector.broadcast %cst : f32 to vector<32x256xf32>
    %9 = arith.maximumf %7, %8 : vector<32x256xf32>
    %c0_5 = arith.constant 0 : index
    %c0_6 = arith.constant 0 : index
    %10 = vector.load %arg4[%c0_5, %c0_6] : memref<32x32xf32, #tpu.memory_space<vmem>>, vector<32x32xf32>
    %cst_7 = arith.constant dense<0.000000e+00> : vector<32x256xf32>
    %11 = tpu.matmul %10, %9, %cst_7 {dimension_numbers = #tpu.dot_dimension_numbers<[1], [0], [0], [1], [0, 0, 1, 1], [], []>} : vector<32x32xf32>, vector<32x256xf32>, vector<32x256xf32> -> vector<32x256xf32>
    %c0_8 = arith.constant 0 : index
    %c0_9 = arith.constant 0 : index
    %12 = vector.load %arg5[%c0_8, %c0_9] : memref<32x1xf32, #tpu.memory_space<vmem>>, vector<32x1xf32>
    %13 = vector.broadcast %12 : vector<32x1xf32> to vector<32x256xf32>
    %14 = arith.addf %11, %13 : vector<32x256xf32>
    %cst_10 = arith.constant 0.000000e+00 : f32
    %15 = vector.broadcast %cst_10 : f32 to vector<32x256xf32>
    %16 = arith.maximumf %14, %15 : vector<32x256xf32>
    %c0_11 = arith.constant 0 : index
    %c0_12 = arith.constant 0 : index
    %17 = vector.load %arg6[%c0_11, %c0_12] : memref<32x1xf32, #tpu.memory_space<vmem>>, vector<32x1xf32>
    %18 = vector.broadcast %17 : vector<32x1xf32> to vector<32x256xf32>
    %19 = arith.mulf %16, %18 : vector<32x256xf32>
    %cst_13 = arith.constant dense<0.000000e+00> : vector<256xf32>
    %20 = vector.multi_reduction <add>, %19, %cst_13 [0] : vector<32x256xf32> to vector<256xf32>
    %21 = vector.shape_cast %20 : vector<256xf32> to vector<1x256xf32>
    %c0_14 = arith.constant 0 : index
    %c0_15 = arith.constant 0 : index
    %22 = vector.load %arg7[%c0_14, %c0_15] : memref<1x1xf32, #tpu.memory_space<vmem>>, vector<1x1xf32>
    %23 = vector.broadcast %22 : vector<1x1xf32> to vector<1x256xf32>
    %24 = arith.addf %21, %23 : vector<1x256xf32>
    %c0_16 = arith.constant 0 : index
    %c0_17 = arith.constant 0 : index
    %25 = vector.load %arg8[%c0_16, %c0_17] : memref<1x256xf32, #tpu.memory_space<vmem>>, vector<1x256xf32>
    tpu.vector_store %arg8[%c0_16, %c0_17], %24 {strides = array<i32>} : memref<1x256xf32, #tpu.memory_space<vmem>>, vector<1x256xf32>,
    return
  }
  func.func @transform_0(%arg0: i32) -> (i32, i32) {
    %c0_i32 = arith.constant 0 : i32
    %c0_i32_0 = arith.constant 0 : i32
    return %c0_i32, %arg0 : i32, i32
  }
  func.func @transform_1(%arg0: i32) -> (i32, i32) {
    %c0_i32 = arith.constant 0 : i32
    %c0_i32_0 = arith.constant 0 : i32
    %c0_i32_1 = arith.constant 0 : i32
    return %c0_i32, %c0_i32_0 : i32, i32
  }
  func.func @transform_2(%arg0: i32) -> (i32, i32) {
    %c0_i32 = arith.constant 0 : i32
    %c0_i32_0 = arith.constant 0 : i32
    %c0_i32_1 = arith.constant 0 : i32
    return %c0_i32, %c0_i32_0 : i32, i32
  }
  func.func @transform_3(%arg0: i32) -> (i32, i32) {
    %c0_i32 = arith.constant 0 : i32
    %c0_i32_0 = arith.constant 0 : i32
    %c0_i32_1 = arith.constant 0 : i32
    return %c0_i32, %c0_i32_0 : i32, i32
  }
  func.func @transform_4(%arg0: i32) -> (i32, i32) {
    %c0_i32 = arith.constant 0 : i32
    %c0_i32_0 = arith.constant 0 : i32
    %c0_i32_1 = arith.constant 0 : i32
    return %c0_i32, %c0_i32_0 : i32, i32
  }
  func.func @transform_5(%arg0: i32) -> (i32, i32) {
    %c0_i32 = arith.constant 0 : i32
    %c0_i32_0 = arith.constant 0 : i32
    %c0_i32_1 = arith.constant 0 : i32
    return %c0_i32, %c0_i32_0 : i32, i32
  }
  func.func @transform_6(%arg0: i32) -> (i32, i32) {
    %c0_i32 = arith.constant 0 : i32
    %c0_i32_0 = arith.constant 0 : i32
    %c0_i32_1 = arith.constant 0 : i32
    return %c0_i32, %c0_i32_0 : i32, i32
  }
  func.func @transform_7(%arg0: i32) -> (i32, i32) {
    %c0_i32 = arith.constant 0 : i32
    %c0_i32_0 = arith.constant 0 : i32
    return %c0_i32, %arg0 : i32, i32
  }
}

</mosaic_0001>

<llo_original>
// kernel: tpu_custom_call.1
$region0: #{tpu_custom_call.1}
  #allocation0 [shape = 'u32[]', space=smem, size = 0x4, offset = 0x4, fixed_abs, tag = 'smem constant byte address 0x4 - core index']
  #allocation1 [shape = 'u32[144,128]{1,0:T(1,128)}', space=vmem, size = 0x12000, scoped, tag = 'internal scratch']
  #allocation2 [shape = 'f32[1,1]{1,0:T(1,128)S(1)}', space=vmem, size = 0x200, scoped, tag = 'scoped memory for tpu_custom_call.1']
  %s0 = inlined_call_operand.vmem [shape: f32[1,256], index: 0, kind: input, shape index: {}]
  %s1 = inlined_call_operand.vmem [shape: f32[32,1], index: 1, kind: input, shape index: {}]
  %s2 = inlined_call_operand.vmem [shape: f32[32,1], index: 2, kind: input, shape index: {}]
  %s3 = inlined_call_operand.vmem [shape: f32[32,32], index: 3, kind: input, shape index: {}]
  %s4 = inlined_call_operand.vmem [shape: f32[32,1], index: 4, kind: input, shape index: {}]
  %s5 = inlined_call_operand.vmem [shape: f32[32,1], index: 5, kind: input, shape index: {}]
  %s6 = inlined_call_operand.<no memory space> [shape: f32[1,1], index: 6, kind: input, shape index: {}]
  %s7 = inlined_call_operand.hbm [shape: f32[1,256], index: 7, kind: output, shape index: {}]
  %s8 = sld [smem:[#allocation0]]
  $region38: #{tpu_custom_call.1} parent=0
    _
  %s10 = ssub.s32 1, %s8
  %s11 = scalar_select 0, %s10, %s8
  %v12 = vstv %s6
  %13 = vst [vmem:[#allocation2] sm:$0x1] %v12
  $region1: #{tpu_custom_call.1} parent=0
    #allocation3 [shape = 'u8[1024]{0}', space=vmem, size = 0x400, scoped, tag = 'output window, operand 0, single buffered']
    #allocation4 [shape = 's32[1]{0}', space=sflag, size = 0x4, scoped, tag = 'scoped memory for tpu_custom_call.1']
    %14 = vsyncpa [#allocation4], 0
    // Predicated region
    $region2: #{tpu_custom_call.1} parent=1 // pred_check
      _
    $region3: #{tpu_custom_call.1} parent=1 // pred_check_branch
      %16 = sbr.rel (0) target = $region5
    $region4: #{tpu_custom_call.1} parent=1 // pred_region
      _
    $region5: #{tpu_custom_call.1} parent=1 // pred_fallthru
      _
    // Predicated region
    $region6: #{tpu_custom_call.1} parent=1 // pred_check
      _
    $region7: #{tpu_custom_call.1} parent=1 // pred_check_branch
      %18 = sbr.rel (0) target = $region9
    $region8: #{tpu_custom_call.1} parent=1 // pred_region
      _
    $region9: #{tpu_custom_call.1} parent=1 // pred_fallthru
      _
    // Predicated region
    $region10: #{tpu_custom_call.1} parent=1 // pred_check
      _
    $region11: #{tpu_custom_call.1} parent=1 // pred_check_branch
      %20 = sbr.rel (0) target = $region13
    $region12: #{tpu_custom_call.1} parent=1 // pred_region
      _
    $region13: #{tpu_custom_call.1} parent=1 // pred_fallthru
      _
    // Predicated region
    $region14: #{tpu_custom_call.1} parent=1 // pred_check
      _
    $region15: #{tpu_custom_call.1} parent=1 // pred_check_branch
      %22 = sbr.rel (0) target = $region17
    $region16: #{tpu_custom_call.1} parent=1 // pred_region
      _
    $region17: #{tpu_custom_call.1} parent=1 // pred_fallthru
      _
    // Predicated region
    $region18: #{tpu_custom_call.1} parent=1 // pred_check
      _
    $region19: #{tpu_custom_call.1} parent=1 // pred_check_branch
      %24 = sbr.rel (0) target = $region21
    $region20: #{tpu_custom_call.1} parent=1 // pred_region
      _
    $region21: #{tpu_custom_call.1} parent=1 // pred_fallthru
      _
    // Predicated region
    $region22: #{tpu_custom_call.1} parent=1 // pred_check
      _
    $region23: #{tpu_custom_call.1} parent=1 // pred_check_branch
      %26 = sbr.rel (0) target = $region25
    $region24: #{tpu_custom_call.1} parent=1 // pred_region
      _
    $region25: #{tpu_custom_call.1} parent=1 // pred_fallthru
      _
    // Predicated region
    $region26: #{tpu_custom_call.1} parent=1 // pred_check
      _
    $region27: #{tpu_custom_call.1} parent=1 // pred_check_branch
      %28 = sbr.rel (0) target = $region29
    $region28: #{tpu_custom_call.1} parent=1 // pred_region
      _
    $region29: #{tpu_custom_call.1} parent=1 // pred_fallthru
      _
    %v29 = vld [vmem:[%s0] sm:$0x3]
    %v30 = vld [vmem:[%s1] sm:$0xff]
    %v31 = vld [vmem:[%s1 + $0x8] sm:$0xff]
    %v32 = vld [vmem:[%s1 + $0x10] sm:$0xff]
    %v33 = vld [vmem:[%s1 + $0x18] sm:$0xff]
    %35 = vset.pattern.permute.xlu0 0
    %36 = vperm.xlu0 %35, %v30
    %v37 = vpop.permute.xlu0 %36
    %40 = vset.pattern.permute.xlu0 0
    %41 = vperm.xlu0 %40, %v31
    %v42 = vpop.permute.xlu0 %41
    %45 = vset.pattern.permute.xlu0 0
    %46 = vperm.xlu0 %45, %v32
    %v47 = vpop.permute.xlu0 %46
    %50 = vset.pattern.permute.xlu0 0
    %51 = vperm.xlu0 %50, %v33
    %v52 = vpop.permute.xlu0 %51
    %v55 = vlaneseq
    %v56 = vshrl.u32 %v55, 7
    %v57 = vsub.s32 0, %v56
    %v58 = vrot.slane %v29, %v57
    %v59 = vlaneseq
    %v60 = vshrl.u32 %v59, 7
    %v61 = vsub.s32 1, %v60
    %v62 = vrot.slane %v29, %v61
    %v65 = vmul.f32 %v37, %v58
    %v66 = vmul.f32 %v37, %v62
    %v67 = vmul.f32 %v42, %v58
    %v68 = vmul.f32 %v42, %v62
    %v69 = vmul.f32 %v47, %v58
    %v70 = vmul.f32 %v47, %v62
    %v71 = vmul.f32 %v52, %v58
    %v72 = vmul.f32 %v52, %v62
    %v73 = vld [vmem:[%s2] sm:$0xff]
    %v74 = vld [vmem:[%s2 + $0x8] sm:$0xff]
    %v75 = vld [vmem:[%s2 + $0x10] sm:$0xff]
    %v76 = vld [vmem:[%s2 + $0x18] sm:$0xff]
    %78 = vset.pattern.permute.xlu0 0
    %79 = vperm.xlu0 %78, %v73
    %v80 = vpop.permute.xlu0 %79
    %83 = vset.pattern.permute.xlu0 0
    %84 = vperm.xlu0 %83, %v74
    %v85 = vpop.permute.xlu0 %84
    %88 = vset.pattern.permute.xlu0 0
    %89 = vperm.xlu0 %88, %v75
    %v90 = vpop.permute.xlu0 %89
    %93 = vset.pattern.permute.xlu0 0
    %94 = vperm.xlu0 %93, %v76
    %v95 = vpop.permute.xlu0 %94
    %v97 = vadd.f32 %v65, %v80
    %v98 = vadd.f32 %v66, %v80
    %v99 = vadd.f32 %v67, %v85
    %v100 = vadd.f32 %v68, %v85
    %v101 = vadd.f32 %v69, %v90
    %v102 = vadd.f32 %v70, %v90
    %v103 = vadd.f32 %v71, %v95
    %v104 = vadd.f32 %v72, %v95
    %v105 = vmax.f32 %v97, 0.0
    %v106 = vmax.f32 %v98, 0.0
    %v107 = vmax.f32 %v99, 0.0
    %v108 = vmax.f32 %v100, 0.0
    %v109 = vmax.f32 %v101, 0.0
    %v110 = vmax.f32 %v102, 0.0
    %v111 = vmax.f32 %v103, 0.0
    %v112 = vmax.f32 %v104, 0.0
    %v113 = vld [vmem:[%s3] sm:$0xff]
    %v114 = vld [vmem:[%s3 + $0x8] sm:$0xff]
    %v115 = vld [vmem:[%s3 + $0x10] sm:$0xff]
    %v116 = vld [vmem:[%s3 + $0x18] sm:$0xff]
    %v117 = vld [vmem:[%s4] sm:$0xff]
    %v118 = vld [vmem:[%s4 + $0x8] sm:$0xff]
    %v119 = vld [vmem:[%s4 + $0x10] sm:$0xff]
    %v120 = vld [vmem:[%s4 + $0x18] sm:$0xff]
    %122 = vset.pattern.permute.xlu0 0
    %123 = vperm.xlu0 %122, %v117
    %v124 = vpop.permute.xlu0 %123
    %127 = vset.pattern.permute.xlu0 0
    %128 = vperm.xlu0 %127, %v118
    %v129 = vpop.permute.xlu0 %128
    %132 = vset.pattern.permute.xlu0 0
    %133 = vperm.xlu0 %132, %v119
    %v134 = vpop.permute.xlu0 %133
    %137 = vset.pattern.permute.xlu0 0
    %138 = vperm.xlu0 %137, %v120
    %v139 = vpop.permute.xlu0 %138
    %vm141 = vcmask 261120
    %v143 = vsel %vm141, %v113, 0
    %v146 = vsel %vm141, %v114, 0
    %v149 = vsel %vm141, %v115, 0
    %v152 = vsel %vm141, %v116, 0
    %154 = vmatprep.subr.mxu0 %v106
    %155 = vmatpush1.msra.mxu0 %v105
    %156 = vmatprep.subr.mxu0 %v108
    %157 = vmatpush1.msra.mxu0 %v107
    %158 = vmatprep.subr.mxu0 %v110
    %159 = vmatpush1.msra.mxu0 %v109
    %160 = vmatprep.subr.mxu0 %v112
    %161 = vmatpush1.msra.mxu0 %v111
    %162 = vmatprep.subr.mxu0 0.0
    %163 = vmatpush1.msra.mxu0 0.0
    %164 = vmatprep.subr.mxu0 0.0
    %165 = vmatpush1.msra.mxu0 0.0
    %166 = vmatprep.subr.mxu0 0.0
    %167 = vmatpush1.msra.mxu0 0.0
    %168 = vmatprep.subr.mxu0 0.0
    %169 = vmatpush1.msra.mxu0 0.0
    %170 = vmatprep.subr.mxu0 0.0
    %171 = vmatpush1.msra.mxu0 0.0
    %172 = vmatprep.subr.mxu0 0.0
    %173 = vmatpush1.msra.mxu0 0.0
    %174 = vmatprep.subr.mxu0 0.0
    %175 = vmatpush1.msra.mxu0 0.0
    %176 = vmatprep.subr.mxu0 0.0
    %177 = vmatpush1.msra.mxu0 0.0
    %178 = vmatprep.subr.mxu0 0.0
    %179 = vmatpush1.msra.mxu0 0.0
    %180 = vmatprep.subr.mxu0 0.0
    %181 = vmatpush1.msra.mxu0 0.0
    %182 = vmatprep.subr.mxu0 0.0
    %183 = vmatpush1.msra.mxu0 0.0
    %184 = vmatprep.subr.mxu0 0.0
    %185 = vmatpush1.msra.mxu0 0.0
    %186 = vmatprep.subr.mxu0 0.0
    %187 = vmatpush1.msra.mxu0 0.0
    %188 = vmatprep.subr.mxu0 0.0
    %189 = vmatpush1.msra.mxu0 0.0
    %190 = vmatprep.subr.mxu0 0.0
    %191 = vmatpush1.msra.mxu0 0.0
    %192 = vmatprep.subr.mxu0 0.0
    %193 = vmatpush1.msra.mxu0 0.0
    %194 = vmatprep.subr.mxu0 0.0
    %195 = vmatpush1.msra.mxu0 0.0
    %196 = vmatprep.subr.mxu0 0.0
    %197 = vmatpush1.msra.mxu0 0.0
    %198 = vmatprep.subr.mxu0 0.0
    %199 = vmatpush1.msra.mxu0 0.0
    %200 = vmatprep.subr.mxu0 0.0
    %201 = vmatpush1.msra.mxu0 0.0
    %202 = vmatprep.subr.mxu0 0.0
    %203 = vmatpush1.msra.mxu0 0.0
    %204 = vmatprep.subr.mxu0 0.0
    %205 = vmatpush1.msra.mxu0 0.0
    %206 = vmatprep.subr.mxu0 0.0
    %207 = vmatpush1.msra.mxu0 0.0
    %208 = vmatprep.subr.mxu0 0.0
    %209 = vmatpush1.msra.mxu0 0.0
    %210 = vmatprep.subr.mxu0 0.0
    %211 = vmatpush1.msra.mxu0 0.0
    %212 = vmatprep.subr.mxu0 0.0
    %213 = vmatpush1.msra.mxu0 0.0
    %214 = vmatprep.subr.mxu0 0.0
    %215 = vmatpush1.msra.mxu0 0.0
    %216 = vmatprep.subr.mxu0 0.0
    %217 = vmatpush1.msra.mxu0 0.0
    %218 = vmatprep.mubr.f32.mxu0 0.0
    %219 = vmatmul.mubr.f32.gmra.mrb[0].mxu0 %v143
    %v220 = vpop.f32.mrb[0].mxu0
    %v221 = vadd.f32 %v124, %v220
    %v222 = vpop.f32.mrb[0].mxu0
    %v223 = vadd.f32 %v124, %v222
    %224 = vmatprep.mubr.f32.mxu0 0.0
    %225 = vmatmul.mubr.f32.gmra.mrb[0].mxu0 %v146
    %v226 = vpop.f32.mrb[0].mxu0
    %v227 = vadd.f32 %v129, %v226
    %v228 = vpop.f32.mrb[0].mxu0
    %v229 = vadd.f32 %v129, %v228
    %230 = vmatprep.mubr.f32.mxu0 0.0
    %231 = vmatmul.mubr.f32.gmra.mrb[0].mxu0 %v149
    %v232 = vpop.f32.mrb[0].mxu0
    %v233 = vadd.f32 %v134, %v232
    %v234 = vpop.f32.mrb[0].mxu0
    %v235 = vadd.f32 %v134, %v234
    %236 = vmatprep.mubr.f32.mxu0 0.0
    %237 = vmatmul.mubr.f32.gmra.mrb[0].mxu0 %v152
    %v238 = vpop.f32.mrb[0].mxu0
    %v239 = vadd.f32 %v139, %v238
    %v240 = vpop.f32.mrb[0].mxu0
    %v241 = vadd.f32 %v139, %v240
    %242 = vdwg.mxu0
    %v243 = vmax.f32 %v221, 0.0
    %v244 = vmax.f32 %v223, 0.0
    %v245 = vmax.f32 %v227, 0.0
    %v246 = vmax.f32 %v229, 0.0
    %v247 = vmax.f32 %v233, 0.0
    %v248 = vmax.f32 %v235, 0.0
    %v249 = vmax.f32 %v239, 0.0
    %v250 = vmax.f32 %v241, 0.0
    %v251 = vld [vmem:[%s5] sm:$0xff]
    %v252 = vld [vmem:[%s5 + $0x8] sm:$0xff]
    %v253 = vld [vmem:[%s5 + $0x10] sm:$0xff]
    %v254 = vld [vmem:[%s5 + $0x18] sm:$0xff]
    %256 = vset.pattern.permute.xlu0 0
    %257 = vperm.xlu0 %256, %v251
    %v258 = vpop.permute.xlu0 %257
    %261 = vset.pattern.permute.xlu0 0
    %262 = vperm.xlu0 %261, %v252
    %v263 = vpop.permute.xlu0 %262
    %266 = vset.pattern.permute.xlu0 0
    %267 = vperm.xlu0 %266, %v253
    %v268 = vpop.permute.xlu0 %267
    %271 = vset.pattern.permute.xlu0 0
    %272 = vperm.xlu0 %271, %v254
    %v273 = vpop.permute.xlu0 %272
    %v275 = vmul.f32 %v243, %v258
    %v276 = vmul.f32 %v244, %v258
    %v277 = vmul.f32 %v245, %v263
    %v278 = vmul.f32 %v246, %v263
    %v279 = vmul.f32 %v247, %v268
    %v280 = vmul.f32 %v248, %v268
    %v281 = vmul.f32 %v249, %v273
    %v282 = vmul.f32 %v250, %v273
    %v283 = vadd.f32 %v275, %v277
    %v284 = vadd.f32 %v283, %v279
    %v285 = vadd.f32 %v284, %v281
    %v286 = vrot.slane %v285, 4
    %v287 = vadd.f32 %v285, %v286
    %v288 = vrot.slane %v287, 2
    %v289 = vadd.f32 %v287, %v288
    %v290 = vrot.slane %v289, 1
    %v291 = vadd.f32 %v289, %v290
    %v292 = vadd.f32 %v276, %v278
    %v293 = vadd.f32 %v292, %v280
    %v294 = vadd.f32 %v293, %v282
    %v295 = vrot.slane %v294, 4
    %v296 = vadd.f32 %v294, %v295
    %v297 = vrot.slane %v296, 2
    %v298 = vadd.f32 %v296, %v297
    %v299 = vrot.slane %v298, 1
    %v300 = vadd.f32 %v298, %v299
    %v301 = vld [vmem:[#allocation2] sm:$0x1]
    %303 = vset.pattern.permute.xlu0 0
    %304 = vperm.xlu0 %303, %v301
    %v305 = vpop.permute.xlu0 %304
    %v307 = vlaneseq
    %v308 = vshrl.u32 %v307, 7
    %v309 = vsub.s32 0, %v308
    %v310 = vrot.slane %v305, %v309
    %v311 = vadd.f32 %v291, %v310
    %v312 = vadd.f32 %v300, %v310
    %v315 = vcombine.low %v311, %v312
    %v317 = vunpack.c.l.s4 1966171168
    %v318 = vunpack.c.0.s8 %v317
    %v319 = vlaneseq
    %v320 = vshrl.u32 %v319, 7
    %v321 = vsub.s32 %v318, %v320
    %v322 = vrot.slane %v315, %v321
    %v324 = vunpack.c.l.s4 1966171168
    %v325 = vunpack.c.0.s8 %v324
    %v326 = vlaneseq
    %v327 = vshrl.u32 %v326, 7
    %v328 = vsub.s32 %v325, %v327
    %v329 = vrot.slane %v322, %v328
    %v331 = vlaneseq
    %vm332 = vcmp.ge.s32.totalorder %v331, 0
    %vm333 = vcmp.lt.s32.totalorder %v331, 256
    %vm334 = vmand %vm332, %vm333
    %335 = vst.msk [vmem:[#allocation3] sm:$0x3] %vm334, %v329
    // Predicated region
    $region30: #{tpu_custom_call.1} parent=1 // pred_check
      _
    $region31: #{tpu_custom_call.1} parent=1 // pred_check_branch
      %337 = sbr.rel (0) target = $region33
    $region32: #{tpu_custom_call.1} parent=1 // pred_region
      %s339 = ssub.s32 32, 32
      %340 = vsyncadd [#allocation4], %s339
      %s342 = sshll.u32 [#allocation3], 4
      %s343 = int_to_ptr.vmem [resolvable:$true] %s342
      %345 = dma.vmem_to_hbm [thread:$0]  %s343, 32, %s7, [#allocation4]
    $region33: #{tpu_custom_call.1} parent=1 // pred_fallthru
      _
    // Predicated region
    $region34: #{tpu_custom_call.1} parent=1 // pred_check
      _
    $region35: #{tpu_custom_call.1} parent=1 // pred_check_branch
      %347 = sbr.rel (0) target = $region37
    $region36: #{tpu_custom_call.1} parent=1 // pred_region
      %348 = dma.done [#allocation4], 32
    $region37: #{tpu_custom_call.1} parent=1 // pred_fallthru
      _
    %349 = vsyncpa [#allocation4], 1

</llo_original>
